<compile_context>
chip_gen: v6e
topology: v6e:2x2x1
jax: 0.10.0
libtpu: 0.0.40
codegen_flags: <defaults>
</compile_context>

<pallas_src>
import jax
import jax.numpy as jnp
from jax import lax
from jax.experimental import pallas as pl
from jax.experimental.pallas import tpu as pltpu


def _log_softmax_rows(logits):
    # LogSoftmax(dim=-1): x - max(x) - log(sum(exp(x - max(x))))
    m = jnp.max(logits, axis=-1, keepdims=True)
    shifted = logits - m
    lse = jnp.log(jnp.sum(jnp.exp(shifted), axis=-1, keepdims=True))
    return shifted - lse


def _generator_vpu_kernel(z_ref, w_ref, b_ref, o_ref):
    # Tiny batch (B <= 8): an MXU matmul would be pure push/drain latency with
    # ~0% array utilization, so use VPU broadcast-multiply + XLU lane-reduce.
    z = z_ref[...]                                    # (B, K)
    w = w_ref[...]                                    # (N, K), PyTorch layout
    prod = z[:, None, :] * w[None, :, :]              # (B, N, K)
    logits = jnp.sum(prod, axis=-1) + b_ref[...]      # (B, N)
    o_ref[...] = _log_softmax_rows(logits).astype(o_ref.dtype)


def _generator_mxu_kernel(z_ref, w_ref, b_ref, o_ref):
    # z: (tb, K) (or (B, K) in the gridless mid-size path), w: (N, K), b: (1, N)
    # Contract K on the MXU with f32 accumulation; no wrapper-side transpose.
    logits = lax.dot_general(
        z_ref[...], w_ref[...],
        dimension_numbers=(((1,), (1,)), ((), ())),
        preferred_element_type=jnp.float32,
    ) + b_ref[...]
    o_ref[...] = _log_softmax_rows(logits).astype(o_ref.dtype)
    # TODO(synk): output is lane-sparse (N=4 of 128 lanes); the real fix is
    # fusing the consumer of the log-probs into this kernel.


def generator_forward(z, w, b, *, block_b=1024):
    """Fused Linear + LogSoftmax.

    z: (B, K) f32 inputs, w: (N, K) f32 (PyTorch nn.Linear weight layout),
    b: (N,) f32.  Returns (B, N) f32 log-probabilities.
    """
    B, K = z.shape
    N = w.shape[0]
    b2 = jnp.reshape(b, (1, N)).astype(jnp.float32)

    cost = pl.CostEstimate(
        flops=2 * B * K * N,
        transcendentals=B * N + B,                   # exp per logit + log per row
        bytes_accessed=4 * (B * K + N * K + N + B * N),
    )

    if B <= 256:
        # Whole problem fits comfortably in VMEM: gridless call (no pipeline
        # prologue/epilogue), everything resident, zero wrapper-side copies.
        vmem = pl.BlockSpec(memory_space=pltpu.MemorySpace.VMEM)
        kernel = _generator_vpu_kernel if B <= 8 else _generator_mxu_kernel
        return pl.pallas_call(
            kernel,
            out_shape=jax.ShapeDtypeStruct((B, N), jnp.float32),
            in_specs=[vmem, vmem, vmem],
            out_specs=vmem,
            cost_estimate=cost,
        )(z, w, b2)

    # Batched path: tile rows of z / out with a parallel 1-D grid; weight and
    # bias (~16 KB) stay resident via constant index_maps.  No padding: K is the
    # full last dim and the edge row tile is a partial block (masked writeback,
    # all per-row math is row-local so garbage edge rows never leak).
    tb = int(block_b)
    if B <= 2 * tb:
        # Ensure >= 2 tiles so megacore ("parallel") can shard across both
        # TensorCores on v7x; keep sublane (8) alignment.
        tb = 8 * pl.cdiv(pl.cdiv(B, 2), 8)
    tb = max(8, min(tb, 8 * pl.cdiv(B, 8)))

    return pl.pallas_call(
        _generator_mxu_kernel,
        out_shape=jax.ShapeDtypeStruct((B, N), jnp.float32),
        grid_spec=pltpu.PrefetchScalarGridSpec(
            num_scalar_prefetch=0,
            grid=(pl.cdiv(B, tb),),
            in_specs=[
                pl.BlockSpec((tb, K), lambda i: (i, 0)),   # z row tile
                pl.BlockSpec((N, K), lambda i: (0, 0)),    # weight, resident
                pl.BlockSpec((1, N), lambda i: (0, 0)),    # bias, resident
            ],
            out_specs=pl.BlockSpec((tb, N), lambda i: (i, 0)),
        ),
        compiler_params=pltpu.CompilerParams(
            dimension_semantics=("parallel",),  # independent row tiles
        ),
        cost_estimate=cost,
    )(z, w, b2)


def reference_forward(z, w, b):
    logits = jnp.dot(z, w.T, precision=jax.lax.Precision.HIGHEST) + b
    return jax.nn.log_softmax(logits, axis=-1)


if __name__ == "__main__":
    key = jax.random.PRNGKey(0)
    k_z, k_w, k_b, k_zm, k_zb = jax.random.split(key, 5)

    cnn_output_size = 1000          # nn.Linear(in_features=1000, out_features=4)
    out_features = 4

    # Deterministic parameter init (mimic nn.Linear uniform(-1/sqrt(in), 1/sqrt(in)))
    bound = 1.0 / jnp.sqrt(jnp.float32(cnn_output_size))
    w = jax.random.uniform(k_w, (out_features, cnn_output_size),
                           minval=-bound, maxval=bound, dtype=jnp.float32)
    b = jax.random.uniform(k_b, (out_features,),
                           minval=-bound, maxval=bound, dtype=jnp.float32)

    # 1) Tiny batch (B=2): gridless, VMEM-resident, VPU/XLU path.
    B = 2
    z = jax.random.normal(k_z, (B, cnn_output_size), dtype=jnp.float32)
    out = jax.block_until_ready(generator_forward(z, w, b))
    ref = reference_forward(z, w, b)
    assert out.shape == (B, out_features)
    assert jnp.allclose(out, ref, atol=1e-4, rtol=1e-4), "tiny-batch mismatch"

    # 2) Mid batch (B=64): gridless MXU path (no degenerate grid=(1,) pipeline).
    B_mid = 64
    z_mid = jax.random.normal(k_zm, (B_mid, cnn_output_size), dtype=jnp.float32)
    out_mid = jax.block_until_ready(generator_forward(z_mid, w, b))
    ref_mid = reference_forward(z_mid, w, b)
    assert out_mid.shape == (B_mid, out_features)
    assert jnp.allclose(out_mid, ref_mid, atol=1e-4, rtol=1e-4), "mid-batch mismatch"

    # 3) Large batch (B=300, block_b=128): row-tiled parallel grid with a
    #    partial edge tile (300 = 2*128 + 44), no wrapper-side padding.
    B_big = 300
    z_big = jax.random.normal(k_zb, (B_big, cnn_output_size), dtype=jnp.float32)
    out_big = jax.block_until_ready(generator_forward(z_big, w, b, block_b=128))
    ref_big = reference_forward(z_big, w, b)
    assert out_big.shape == (B_big, out_features)
    assert jnp.allclose(out_big, ref_big, atol=1e-4, rtol=1e-4), "batched mismatch"

    # 3b) Same large batch through the default tile-size heuristic (2-tile megacore split).
    out_big2 = jax.block_until_ready(generator_forward(z_big, w, b))
    assert jnp.allclose(out_big2, ref_big, atol=1e-4, rtol=1e-4), "default-tile mismatch"

    print("KERNEL_OK")
</pallas_src>

<mosaic_0001>
module attributes {stable_mosaic.version = 11 : i64} {
  func.func @_generator_vpu_kernel(%arg0: memref<2x1000xf32, #tpu.memory_space<vmem>>, %arg1: memref<4x1000xf32, #tpu.memory_space<vmem>>, %arg2: memref<1x4xf32, #tpu.memory_space<vmem>>, %arg3: memref<2x4xf32, #tpu.memory_space<vmem>>) attributes {dimension_semantics = [], scalar_prefetch = 0 : i64, scratch_operands = 0 : i64, tpu.core_type = #tpu.core_type<tc>} {
    %c0 = arith.constant 0 : index
    %c0_0 = arith.constant 0 : index
    %0 = vector.load %arg0[%c0, %c0_0] : memref<2x1000xf32, #tpu.memory_space<vmem>>, vector<2x1000xf32>
    %c0_1 = arith.constant 0 : index
    %c0_2 = arith.constant 0 : index
    %1 = vector.load %arg1[%c0_1, %c0_2] : memref<4x1000xf32, #tpu.memory_space<vmem>>, vector<4x1000xf32>
    %2 = vector.shape_cast %0 : vector<2x1000xf32> to vector<2x1x1000xf32>
    %3 = vector.shape_cast %1 : vector<4x1000xf32> to vector<1x4x1000xf32>
    %4 = vector.broadcast %2 : vector<2x1x1000xf32> to vector<2x4x1000xf32>
    %5 = vector.broadcast %3 : vector<1x4x1000xf32> to vector<2x4x1000xf32>
    %6 = arith.mulf %4, %5 : vector<2x4x1000xf32>
    %cst = arith.constant dense<0.000000e+00> : vector<2x4xf32>
    %7 = vector.multi_reduction <add>, %6, %cst [2] : vector<2x4x1000xf32> to vector<2x4xf32>
    %c0_3 = arith.constant 0 : index
    %c0_4 = arith.constant 0 : index
    %8 = vector.load %arg2[%c0_3, %c0_4] : memref<1x4xf32, #tpu.memory_space<vmem>>, vector<1x4xf32>
    %9 = vector.broadcast %8 : vector<1x4xf32> to vector<2x4xf32>
    %10 = arith.addf %7, %9 : vector<2x4xf32>
    %cst_5 = arith.constant dense<0xFF800000> : vector<2xf32>
    %11 = vector.multi_reduction <maximumf>, %10, %cst_5 [1] : vector<2x4xf32> to vector<2xf32>
    %12 = vector.shape_cast %11 : vector<2xf32> to vector<2x1xf32>
    %13 = vector.broadcast %12 : vector<2x1xf32> to vector<2x4xf32>
    %14 = arith.subf %10, %13 : vector<2x4xf32>
    %15 = math.exp %14 : vector<2x4xf32>
    %cst_6 = arith.constant dense<0.000000e+00> : vector<2xf32>
    %16 = vector.multi_reduction <add>, %15, %cst_6 [1] : vector<2x4xf32> to vector<2xf32>
    %17 = vector.shape_cast %16 : vector<2xf32> to vector<2x1xf32>
    %18 = math.log %17 : vector<2x1xf32>
    %19 = vector.broadcast %18 : vector<2x1xf32> to vector<2x4xf32>
    %20 = arith.subf %14, %19 : vector<2x4xf32>
    %c0_7 = arith.constant 0 : index
    %c0_8 = arith.constant 0 : index
    %21 = vector.load %arg3[%c0_7, %c0_8] : memref<2x4xf32, #tpu.memory_space<vmem>>, vector<2x4xf32>
    tpu.vector_store %arg3[%c0_7, %c0_8], %20 {strides = array<i32>} : memref<2x4xf32, #tpu.memory_space<vmem>>, vector<2x4xf32>,
    return
  }
}

</mosaic_0001>

<llo_original>
// kernel: tpu_custom_call.1
$region0: #{tpu_custom_call.1}
  #allocation0 [shape = 'u32[]', space=smem, size = 0x4, offset = 0x4, fixed_abs, tag = 'smem constant byte address 0x4 - core index']
  #allocation1 [shape = 'u32[144,128]{1,0:T(1,128)}', space=vmem, size = 0x12000, scoped, tag = 'internal scratch']
  %s0 = inlined_call_operand.hbm [shape: f32[2,1000], index: 0, kind: input, shape index: {}]
  %s1 = inlined_call_operand.hbm [shape: f32[4,1000], index: 1, kind: input, shape index: {}]
  %s2 = inlined_call_operand.vmem [shape: f32[1,4], index: 2, kind: input, shape index: {}]
  %s3 = inlined_call_operand.hbm [shape: f32[2,4], index: 3, kind: output, shape index: {}]
  %s4 = sld [smem:[#allocation0]]
  $region30: #{tpu_custom_call.1} parent=0
    _
  %s6 = ssub.s32 1, %s4
  %s7 = scalar_select 0, %s6, %s4
  $region1: #{tpu_custom_call.1} parent=0
    #allocation2 [shape = 'u8[8192]{0}', space=vmem, size = 0x2000, scoped, tag = 'input window, operand 0, single buffered']
    #allocation3 [shape = 's32[1]{0}', space=sflag, size = 0x4, scoped, tag = 'scoped memory for tpu_custom_call.1']
    #allocation4 [shape = 's32[1]{0}', space=sflag, size = 0x4, scoped, tag = 'scoped memory for tpu_custom_call.1']
    #allocation5 [shape = 'u8[16384]{0}', space=vmem, size = 0x4000, scoped, tag = 'input window, operand 1, single buffered']
    #allocation6 [shape = 's32[1]{0}', space=sflag, size = 0x4, scoped, tag = 'scoped memory for tpu_custom_call.1']
    #allocation7 [shape = 'u8[1024]{0}', space=vmem, size = 0x400, scoped, tag = 'output window, operand 0, single buffered']
    %8 = vsyncpa [#allocation3], 0
    %9 = vsyncpa [#allocation6], 0
    %10 = vsyncpa [#allocation4], 0
    // Predicated region
    $region2: #{tpu_custom_call.1} parent=1 // pred_check
      _
    $region3: #{tpu_custom_call.1} parent=1 // pred_check_branch
      %12 = sbr.rel (0) target = $region5
    $region4: #{tpu_custom_call.1} parent=1 // pred_region
      %s14 = ssub.s32 256, 256
      %15 = vsyncadd [#allocation3], %s14
      %s17 = sshll.u32 [#allocation2], 4
      %s18 = int_to_ptr.vmem [resolvable:$true] %s17
      %20 = dma.hbm_to_vmem [thread:$0]  %s0, 256, %s18, [#allocation3]
    $region5: #{tpu_custom_call.1} parent=1 // pred_fallthru
      _
    // Predicated region
    $region6: #{tpu_custom_call.1} parent=1 // pred_check
      _
    $region7: #{tpu_custom_call.1} parent=1 // pred_check_branch
      %22 = sbr.rel (0) target = $region9
    $region8: #{tpu_custom_call.1} parent=1 // pred_region
      %s24 = ssub.s32 512, 512
      %25 = vsyncadd [#allocation6], %s24
      %s27 = sshll.u32 [#allocation5], 4
      %s28 = int_to_ptr.vmem [resolvable:$true] %s27
      %30 = dma.hbm_to_vmem [thread:$0]  %s1, 512, %s28, [#allocation6]
    $region9: #{tpu_custom_call.1} parent=1 // pred_fallthru
      _
    // Predicated region
    $region10: #{tpu_custom_call.1} parent=1 // pred_check
      _
    $region11: #{tpu_custom_call.1} parent=1 // pred_check_branch
      %32 = sbr.rel (0) target = $region13
    $region12: #{tpu_custom_call.1} parent=1 // pred_region
      _
    $region13: #{tpu_custom_call.1} parent=1 // pred_fallthru
      _
    // Predicated region
    $region14: #{tpu_custom_call.1} parent=1 // pred_check
      _
    $region15: #{tpu_custom_call.1} parent=1 // pred_check_branch
      %34 = sbr.rel (0) target = $region17
    $region16: #{tpu_custom_call.1} parent=1 // pred_region
      %35 = dma.done [#allocation3], 256
    $region17: #{tpu_custom_call.1} parent=1 // pred_fallthru
      _
    // Predicated region
    $region18: #{tpu_custom_call.1} parent=1 // pred_check
      _
    $region19: #{tpu_custom_call.1} parent=1 // pred_check_branch
      %37 = sbr.rel (0) target = $region21
    $region20: #{tpu_custom_call.1} parent=1 // pred_region
      %38 = dma.done [#allocation6], 512
    $region21: #{tpu_custom_call.1} parent=1 // pred_fallthru
      _
    %v39 = vld [vmem:[#allocation2] sm:$0xff]
    %v40 = vld [vmem:[#allocation2 + $0x8] sm:$0xff]
    %v41 = vld [vmem:[#allocation5] sm:$0xff]
    %v42 = vld [vmem:[#allocation5 + $0x8] sm:$0xff]
    %v43 = vld [vmem:[#allocation5 + $0x10] sm:$0xff]
    %v44 = vld [vmem:[#allocation5 + $0x18] sm:$0xff]
    %v48 = vunpack.c.l.s4 1966171168
    %v49 = vunpack.c.0.s8 %v48
    %v50 = vlaneseq
    %v51 = vshrl.u32 %v50, 7
    %v52 = vsub.s32 %v49, %v51
    %v53 = vrot.slane %v39, %v52
    %v55 = vunpack.c.l.s4 1966171168
    %v56 = vunpack.c.0.s8 %v55
    %v57 = vlaneseq
    %v58 = vshrl.u32 %v57, 7
    %v59 = vsub.s32 %v56, %v58
    %v60 = vrot.slane %v40, %v59
    %v61 = vcombine.low %v53, %v60
    %v62 = vcombine.high %v53, %v60
    %v63 = vlaneseq
    %v64 = vshrl.u32 %v63, 7
    %v65 = vsub.s32 0, %v64
    %v66 = vrot.slane %v61, %v65
    %v67 = vlaneseq
    %v68 = vshrl.u32 %v67, 7
    %v69 = vsub.s32 1, %v68
    %v70 = vrot.slane %v61, %v69
    %v71 = vlaneseq
    %v72 = vshrl.u32 %v71, 7
    %v73 = vsub.s32 2, %v72
    %v74 = vrot.slane %v61, %v73
    %v75 = vlaneseq
    %v76 = vshrl.u32 %v75, 7
    %v77 = vsub.s32 3, %v76
    %v78 = vrot.slane %v61, %v77
    %v79 = vlaneseq
    %v80 = vshrl.u32 %v79, 7
    %v81 = vsub.s32 4, %v80
    %v82 = vrot.slane %v61, %v81
    %v83 = vlaneseq
    %v84 = vshrl.u32 %v83, 7
    %v85 = vsub.s32 5, %v84
    %v86 = vrot.slane %v61, %v85
    %v87 = vlaneseq
    %v88 = vshrl.u32 %v87, 7
    %v89 = vsub.s32 6, %v88
    %v90 = vrot.slane %v61, %v89
    %v91 = vlaneseq
    %v92 = vshrl.u32 %v91, 7
    %v93 = vsub.s32 7, %v92
    %v94 = vrot.slane %v61, %v93
    %v95 = vlaneseq
    %v96 = vshrl.u32 %v95, 7
    %v97 = vsub.s32 0, %v96
    %v98 = vrot.slane %v62, %v97
    %v99 = vlaneseq
    %v100 = vshrl.u32 %v99, 7
    %v101 = vsub.s32 1, %v100
    %v102 = vrot.slane %v62, %v101
    %v103 = vlaneseq
    %v104 = vshrl.u32 %v103, 7
    %v105 = vsub.s32 2, %v104
    %v106 = vrot.slane %v62, %v105
    %v107 = vlaneseq
    %v108 = vshrl.u32 %v107, 7
    %v109 = vsub.s32 3, %v108
    %v110 = vrot.slane %v62, %v109
    %v111 = vlaneseq
    %v112 = vshrl.u32 %v111, 7
    %v113 = vsub.s32 4, %v112
    %v114 = vrot.slane %v62, %v113
    %v115 = vlaneseq
    %v116 = vshrl.u32 %v115, 7
    %v117 = vsub.s32 5, %v116
    %v118 = vrot.slane %v62, %v117
    %v119 = vlaneseq
    %v120 = vshrl.u32 %v119, 7
    %v121 = vsub.s32 6, %v120
    %v122 = vrot.slane %v62, %v121
    %v123 = vlaneseq
    %v124 = vshrl.u32 %v123, 7
    %v125 = vsub.s32 7, %v124
    %v126 = vrot.slane %v62, %v125
    %v147 = vcombine.high %v41, %v41
    %v148 = vcombine.high %v42, %v42
    %v149 = vcombine.high %v43, %v43
    %v150 = vcombine.high %v44, %v44
    %v155 = vmul.f32 %v66, %v41
    %v156 = vmul.f32 %v70, %v147
    %v157 = vmul.f32 %v74, %v42
    %v158 = vmul.f32 %v78, %v148
    %v159 = vmul.f32 %v82, %v43
    %v160 = vmul.f32 %v86, %v149
    %v161 = vmul.f32 %v90, %v44
    %v162 = vmul.f32 %v94, %v150
    %v163 = vmul.f32 %v98, %v41
    %v164 = vmul.f32 %v102, %v147
    %v165 = vmul.f32 %v106, %v42
    %v166 = vmul.f32 %v110, %v148
    %v167 = vmul.f32 %v114, %v43
    %v168 = vmul.f32 %v118, %v149
    %v169 = vmul.f32 %v122, %v44
    %v170 = vmul.f32 %v126, %v150
    %vm171 = vcmask 1043456
    %v172 = vsel %vm171, %v155, 0.0
    %v173 = vsel %vm171, %v156, 0.0
    %v174 = vadd.f32 %v172, %v173
    %v175 = vsel %vm171, %v157, 0.0
    %v176 = vadd.f32 %v174, %v175
    %v177 = vsel %vm171, %v158, 0.0
    %v178 = vadd.f32 %v176, %v177
    %v179 = vsel %vm171, %v159, 0.0
    %v180 = vadd.f32 %v178, %v179
    %v181 = vsel %vm171, %v160, 0.0
    %v182 = vadd.f32 %v180, %v181
    %v183 = vsel %vm171, %v161, 0.0
    %v184 = vadd.f32 %v182, %v183
    %vm185 = vcmask 846848
    %v186 = vsel %vm185, %v162, 0.0
    %v187 = vadd.f32 %v184, %v186
    %188 = vadd.xlane.f32.xlu0 %v187
    %v189 = vpop.xlane.xlu0 %188
    %v190 = vsel %vm171, %v163, 0.0
    %v191 = vsel %vm171, %v164, 0.0
    %v192 = vadd.f32 %v190, %v191
    %v193 = vsel %vm171, %v165, 0.0
    %v194 = vadd.f32 %v192, %v193
    %v195 = vsel %vm171, %v166, 0.0
    %v196 = vadd.f32 %v194, %v195
    %v197 = vsel %vm171, %v167, 0.0
    %v198 = vadd.f32 %v196, %v197
    %v199 = vsel %vm171, %v168, 0.0
    %v200 = vadd.f32 %v198, %v199
    %v201 = vsel %vm171, %v169, 0.0
    %v202 = vadd.f32 %v200, %v201
    %v203 = vsel %vm185, %v170, 0.0
    %v204 = vadd.f32 %v202, %v203
    %205 = vadd.xlane.f32.xlu0 %v204
    %v206 = vpop.xlane.xlu0 %205
    %v207 = vld [vmem:[%s2] sm:$0x1]
    %v209 = vlaneseq
    %v210 = vshrl.u32 %v209, 7
    %v211 = vsub.s32 0, %v210
    %v212 = vrot.slane %v207, %v211
    %214 = vbcast.lane.b32.xlu0 %v212, 256
    %v215 = vpop.permute.xlu0 %214
    %v217 = vadd.f32 %v189, %v215
    %v218 = vadd.f32 %v206, %v215
    %221 = vset.pattern.permute.xlu0 0
    %222 = vperm.xlu0 %221, %v217
    %v223 = vpop.permute.xlu0 %222
    %224 = vset.pattern.permute.xlu0 0
    %225 = vperm.xlu0 %224, %v218
    %v226 = vpop.permute.xlu0 %225
    %v227 = vlaneseq
    %v228 = vand.u32 %v227, 127
    %v229 = vlaneseq
    %v230 = vshrl.u32 %v229, 7
    %v231 = vsub.s32 %v228, %v230
    %v232 = vrot.slane %v223, %v231
    %v233 = vlaneseq
    %v234 = vshrl.u32 %v233, 7
    %v235 = vsub.s32 %v228, %v234
    %v236 = vrot.slane %v226, %v235
    %vm237 = vcmask 1041409
    %v238 = vsel %vm237, %v236, %v232
    %vm240 = vcmask 25600
    %v241 = vsel %vm240, %v238, -inf
    %242 = vmax.xlane.f32.xlu0 %v241
    %v243 = vpop.xlane.xlu0 %242
    %v245 = vlaneseq
    %v246 = vshrl.u32 %v245, 7
    %v247 = vsub.s32 0, %v246
    %v248 = vrot.slane %v243, %v247
    %v249 = vlaneseq
    %v250 = vshrl.u32 %v249, 7
    %v251 = vsub.s32 1, %v250
    %v252 = vrot.slane %v243, %v251
    %v255 = vsub.f32 %v217, %v248
    %v256 = vsub.f32 %v218, %v252
    %v257 = vmul.f32 %v255, 1.442695
    %v258 = vpow.pop %v257
    %v259 = vmul.f32 %v256, 1.442695
    %v260 = vpow.pop %v259
    %263 = vset.pattern.permute.xlu0 0
    %264 = vperm.xlu0 %263, %v258
    %v265 = vpop.permute.xlu0 %264
    %266 = vset.pattern.permute.xlu0 0
    %267 = vperm.xlu0 %266, %v260
    %v268 = vpop.permute.xlu0 %267
    %v269 = vlaneseq
    %v270 = vshrl.u32 %v269, 7
    %v271 = vsub.s32 %v228, %v270
    %v272 = vrot.slane %v265, %v271
    %v273 = vlaneseq
    %v274 = vshrl.u32 %v273, 7
    %v275 = vsub.s32 %v228, %v274
    %v276 = vrot.slane %v268, %v275
    %v277 = vsel %vm237, %v276, %v272
    %v279 = vsel %vm240, %v277, 0.0
    %280 = vadd.xlane.f32.xlu0 %v279
    %v281 = vpop.xlane.xlu0 %280
    %v282 = vlog2.pop %v281
    %v283 = vmul.f32 %v282, 0.6931472
    %v285 = vlaneseq
    %v286 = vshrl.u32 %v285, 7
    %v287 = vsub.s32 0, %v286
    %v288 = vrot.slane %v283, %v287
    %v289 = vlaneseq
    %v290 = vshrl.u32 %v289, 7
    %v291 = vsub.s32 1, %v290
    %v292 = vrot.slane %v283, %v291
    %v295 = vsub.f32 %v255, %v288
    %v296 = vsub.f32 %v256, %v292
    %299 = vset.pattern.permute.xlu0 0
    %300 = vperm.xlu0 %299, %v295
    %v301 = vpop.permute.xlu0 %300
    %302 = vset.pattern.permute.xlu0 0
    %303 = vperm.xlu0 %302, %v296
    %v304 = vpop.permute.xlu0 %303
    %v305 = vlaneseq
    %v306 = vshrl.u32 %v305, 7
    %v307 = vsub.s32 %v228, %v306
    %v308 = vrot.slane %v301, %v307
    %v309 = vlaneseq
    %v310 = vshrl.u32 %v309, 7
    %v311 = vsub.s32 %v228, %v310
    %v312 = vrot.slane %v304, %v311
    %v313 = vsel %vm237, %v312, %v308
    %315 = vst.msk [vmem:[#allocation7] sm:$0x3] %vm240, %v313
    // Predicated region
    $region22: #{tpu_custom_call.1} parent=1 // pred_check
      _
    $region23: #{tpu_custom_call.1} parent=1 // pred_check_branch
      %317 = sbr.rel (0) target = $region25
    $region24: #{tpu_custom_call.1} parent=1 // pred_region
      %s319 = ssub.s32 32, 32
      %320 = vsyncadd [#allocation4], %s319
      %s322 = sshll.u32 [#allocation7], 4
      %s323 = int_to_ptr.vmem [resolvable:$true] %s322
      %325 = dma.vmem_to_hbm [thread:$0]  %s323, 32, %s3, [#allocation4]
    $region25: #{tpu_custom_call.1} parent=1 // pred_fallthru
      _
    // Predicated region
    $region26: #{tpu_custom_call.1} parent=1 // pred_check
      _
    $region27: #{tpu_custom_call.1} parent=1 // pred_check_branch
      %327 = sbr.rel (0) target = $region29
    $region28: #{tpu_custom_call.1} parent=1 // pred_region
      %328 = dma.done [#allocation4], 32
    $region29: #{tpu_custom_call.1} parent=1 // pred_fallthru
      _
    %329 = vsyncpa [#allocation3], 1
    %330 = vsyncpa [#allocation6], 1
    %331 = vsyncpa [#allocation4], 1

</llo_original>
